<compile_context>
chip_gen: v7x
topology: tpu7x:2x2x1
jax: 0.10.0
libtpu: 0.0.40
codegen_flags: <defaults>
</compile_context>

<pallas_src>
import jax
import jax.numpy as jnp
from jax.experimental import pallas as pl
from jax.experimental.pallas import tpu as pltpu

LANE = 128     # lane width: hidden dim padded to this so h is lane-dense
SUBLANE = 8    # sublane granularity for the batch (second-to-last) dim


def _round_up(x, m):
    return (x + m - 1) // m * m


def two_layer_kernel(x_ref, w1_ref, b1_ref, w2_ref, b2_ref, o_ref):
    # In-vreg cast of the streamed activation tile (no wrapper-side HBM cast pass).
    x = x_ref[...].astype(w1_ref.dtype)
    # Hidden layer: MXU matmul with f32 accumulate; f32 bias add (VPU) + sigmoid (EUP).
    h = jnp.dot(x, w1_ref[...], preferred_element_type=jnp.float32)
    h = jax.nn.sigmoid(h + b1_ref[...])          # b1 is (1, n_hidden_pad): sublane broadcast
    # Output layer: narrow n_out result; masked store amortized over the large batch tile.
    y = jnp.dot(h.astype(w2_ref.dtype), w2_ref[...], preferred_element_type=jnp.float32)
    y = jax.nn.sigmoid(y + b2_ref[...])          # b2 is (1, n_out)
    o_ref[...] = y.astype(o_ref.dtype)           # (tb, n_out) store — no 128-lane padding


def prepare_params(w1, b1, w2, b2, compute_dtype=jnp.float32):
    """One-time parameter prep (hoisted out of the per-call hot path):
       - transpose PyTorch-layout [out, in] weights to [in, out]
       - zero-pad n_hidden up to a multiple of 128 lanes (w1 cols, b1, w2 rows) so the
         intermediate h is lane-dense; padded h columns are sigmoid(0)=0.5 but multiply
         zero rows of w2, so numerics are unchanged.
       - keep biases 2-D (1, n) and in f32 so elementwise math stays f32 on all chips.
       On v6e/v7x pass compute_dtype=jnp.bfloat16 if accuracy allows (f32 accumulate kept)."""
    n_hidden, n_in = w1.shape
    n_out = w2.shape[0]
    n_hidden_pad = _round_up(n_hidden, LANE)
    w1_t = jnp.zeros((n_in, n_hidden_pad), compute_dtype).at[:, :n_hidden].set(
        jnp.asarray(w1.T, compute_dtype))                                   # [n_in, 128k]
    b1_2d = jnp.zeros((1, n_hidden_pad), jnp.float32).at[:, :n_hidden].set(
        jnp.asarray(b1, jnp.float32))
    w2_t = jnp.zeros((n_hidden_pad, n_out), compute_dtype).at[:n_hidden, :].set(
        jnp.asarray(w2.T, compute_dtype))                                   # [128k, n_out]
    b2_2d = jnp.asarray(b2, jnp.float32).reshape(1, n_out)
    return w1_t, b1_2d, w2_t, b2_2d, n_out


def two_layer_net(x, w1_t, b1, w2_t, b2, n_out, *, block_b=2048, out_dtype=jnp.float32):
    """x: [B, n_in] (any float dtype); params already prepared by prepare_params().
       On v7x, consider block_b=4096-8192 while keeping B // block_b >= 2 so the
       'parallel' batch axis actually splits across both TensorCores."""
    B, n_in = x.shape
    n_hidden_pad = w1_t.shape[1]

    # Batch tile: as large as useful (amortizes per-step pipeline overhead),
    # multiple of 8 sublanes. No wrapper-side cast of x; kernel casts in-vreg.
    if B <= block_b:
        tb = _round_up(B, SUBLANE)
    else:
        tb = _round_up(block_b, SUBLANE)
    b_pad = _round_up(B, tb)
    if b_pad != B:
        # Ragged tail only; callers can pick B a multiple of block_b to skip this pass.
        x = jnp.pad(x, ((0, b_pad - B), (0, 0)))

    out = pl.pallas_call(
        two_layer_kernel,
        out_shape=jax.ShapeDtypeStruct((b_pad, n_out), out_dtype),
        grid_spec=pltpu.PrefetchScalarGridSpec(
            num_scalar_prefetch=0,
            grid=(b_pad // tb,),
            in_specs=[
                pl.BlockSpec((tb, n_in), lambda i: (i, 0)),             # x tile streams per step
                pl.BlockSpec((n_in, n_hidden_pad), lambda i: (0, 0)),   # weights VMEM-resident
                pl.BlockSpec((1, n_hidden_pad), lambda i: (0, 0)),
                pl.BlockSpec((n_hidden_pad, n_out), lambda i: (0, 0)),
                pl.BlockSpec((1, n_out), lambda i: (0, 0)),
            ],
            out_specs=pl.BlockSpec((tb, n_out), lambda i: (i, 0)),      # narrow, unpadded out
        ),
        compiler_params=pltpu.CompilerParams(
            # Independent batch tiles -> legal to shard across v7x's 2 TensorCores.
            dimension_semantics=("parallel",),
            # Explicit budget so large batch tiles aren't rejected by the 16 MiB
            # default scoped limit on v5e; tiles are tiny vs. this budget anyway.
            vmem_limit_bytes=32 * 1024 * 1024,
        ),
    )(x, w1_t, b1, w2_t, b2)

    if b_pad != B:
        out = out[:B]
    return out


def init_params(key, n_input, n_hidden, n_output):
    """Deterministic init mimicking torch.nn.Linear's uniform(-1/sqrt(fan_in), 1/sqrt(fan_in))."""
    k1, k2, k3, k4 = jax.random.split(key, 4)
    bound1 = 1.0 / (n_input ** 0.5)
    bound2 = 1.0 / (n_hidden ** 0.5)
    w1 = jax.random.uniform(k1, (n_hidden, n_input), jnp.float32, -bound1, bound1)
    b1 = jax.random.uniform(k2, (n_hidden,), jnp.float32, -bound1, bound1)
    w2 = jax.random.uniform(k3, (n_output, n_hidden), jnp.float32, -bound2, bound2)
    b2 = jax.random.uniform(k4, (n_output,), jnp.float32, -bound2, bound2)
    return w1, b1, w2, b2


if __name__ == "__main__":
    key = jax.random.PRNGKey(0)
    n_input, n_hidden, n_output = 16, 32, 8
    batch = 8

    kx, kp = jax.random.split(key)
    x = jax.random.normal(kx, (batch, n_input), jnp.float32)
    w1, b1, w2, b2 = init_params(kp, n_input, n_hidden, n_output)

    # One-time (hoisted) parameter prep, then the hot-path call.
    w1_t, b1_2d, w2_t, b2_2d, n_out = prepare_params(w1, b1, w2, b2)
    y = two_layer_net(x, w1_t, b1_2d, w2_t, b2_2d, n_out)
    y = jax.block_until_ready(y)

    # Pure-JAX reference check of the same math (PyTorch nn.Linear semantics).
    h_ref = jax.nn.sigmoid(x @ w1.T + b1)
    y_ref = jax.nn.sigmoid(h_ref @ w2.T + b2)
    assert y.shape == (batch, n_output)
    assert jnp.allclose(y, y_ref, atol=1e-5), "Pallas output mismatch vs JAX reference"

    print("KERNEL_OK")
</pallas_src>

<mosaic_0001>
module attributes {stable_mosaic.version = 11 : i64} {
  func.func @two_layer_kernel(%arg0: i32, %arg1: memref<8x16xf32, #tpu.memory_space<vmem>>, %arg2: memref<16x128xf32, #tpu.memory_space<vmem>>, %arg3: memref<1x128xf32, #tpu.memory_space<vmem>>, %arg4: memref<128x8xf32, #tpu.memory_space<vmem>>, %arg5: memref<1x8xf32, #tpu.memory_space<vmem>>, %arg6: memref<8x8xf32, #tpu.memory_space<vmem>>) attributes {dimension_semantics = [#tpu.dimension_semantics<parallel>], iteration_bounds = array<i64: 1>, scalar_prefetch = 0 : i64, scratch_operands = 0 : i64, tpu.core_type = #tpu.core_type<tc>, window_params = [{transform_indices = @transform_0, window_bounds = array<i64: 8, 16>}, {pipeline_mode = #tpu.pipeline_mode<synchronous>, transform_indices = @transform_1, window_bounds = array<i64: 16, 128>}, {pipeline_mode = #tpu.pipeline_mode<synchronous>, transform_indices = @transform_2, window_bounds = array<i64: 1, 128>}, {pipeline_mode = #tpu.pipeline_mode<synchronous>, transform_indices = @transform_3, window_bounds = array<i64: 128, 8>}, {pipeline_mode = #tpu.pipeline_mode<synchronous>, transform_indices = @transform_4, window_bounds = array<i64: 1, 8>}, {transform_indices = @transform_5, window_bounds = array<i64: 8, 8>}]} {
    %c0 = arith.constant 0 : index
    %c0_0 = arith.constant 0 : index
    %0 = vector.load %arg1[%c0, %c0_0] : memref<8x16xf32, #tpu.memory_space<vmem>>, vector<8x16xf32>
    %c0_1 = arith.constant 0 : index
    %c0_2 = arith.constant 0 : index
    %1 = vector.load %arg2[%c0_1, %c0_2] : memref<16x128xf32, #tpu.memory_space<vmem>>, vector<16x128xf32>
    %cst = arith.constant dense<0.000000e+00> : vector<8x128xf32>
    %2 = tpu.matmul %0, %1, %cst {dimension_numbers = #tpu.dot_dimension_numbers<[1], [0], [0], [1], [0, 0, 1, 1], [], []>} : vector<8x16xf32>, vector<16x128xf32>, vector<8x128xf32> -> vector<8x128xf32>
    %c0_3 = arith.constant 0 : index
    %c0_4 = arith.constant 0 : index
    %3 = vector.load %arg3[%c0_3, %c0_4] : memref<1x128xf32, #tpu.memory_space<vmem>>, vector<1x128xf32>
    %4 = vector.broadcast %3 : vector<1x128xf32> to vector<8x128xf32>
    %5 = arith.addf %2, %4 : vector<8x128xf32>
    %6 = arith.negf %5 : vector<8x128xf32>
    %7 = math.exp %6 : vector<8x128xf32>
    %cst_5 = arith.constant 1.000000e+00 : f32
    %8 = vector.broadcast %cst_5 : f32 to vector<8x128xf32>
    %9 = arith.addf %8, %7 : vector<8x128xf32>
    %10 = arith.divf %8, %9 : vector<8x128xf32>
    %c0_6 = arith.constant 0 : index
    %c0_7 = arith.constant 0 : index
    %11 = vector.load %arg4[%c0_6, %c0_7] : memref<128x8xf32, #tpu.memory_space<vmem>>, vector<128x8xf32>
    %cst_8 = arith.constant dense<0.000000e+00> : vector<8x8xf32>
    %12 = tpu.matmul %10, %11, %cst_8 {dimension_numbers = #tpu.dot_dimension_numbers<[1], [0], [0], [1], [0, 0, 1, 1], [], []>} : vector<8x128xf32>, vector<128x8xf32>, vector<8x8xf32> -> vector<8x8xf32>
    %c0_9 = arith.constant 0 : index
    %c0_10 = arith.constant 0 : index
    %13 = vector.load %arg5[%c0_9, %c0_10] : memref<1x8xf32, #tpu.memory_space<vmem>>, vector<1x8xf32>
    %14 = vector.broadcast %13 : vector<1x8xf32> to vector<8x8xf32>
    %15 = arith.addf %12, %14 : vector<8x8xf32>
    %16 = arith.negf %15 : vector<8x8xf32>
    %17 = math.exp %16 : vector<8x8xf32>
    %cst_11 = arith.constant 1.000000e+00 : f32
    %18 = vector.broadcast %cst_11 : f32 to vector<8x8xf32>
    %19 = arith.addf %18, %17 : vector<8x8xf32>
    %20 = arith.divf %18, %19 : vector<8x8xf32>
    %c0_12 = arith.constant 0 : index
    %c0_13 = arith.constant 0 : index
    %21 = vector.load %arg6[%c0_12, %c0_13] : memref<8x8xf32, #tpu.memory_space<vmem>>, vector<8x8xf32>
    tpu.vector_store %arg6[%c0_12, %c0_13], %20 {strides = array<i32>} : memref<8x8xf32, #tpu.memory_space<vmem>>, vector<8x8xf32>,
    return
  }
  func.func @transform_0(%arg0: i32) -> (i32, i32) {
    %c0_i32 = arith.constant 0 : i32
    %c0_i32_0 = arith.constant 0 : i32
    return %arg0, %c0_i32 : i32, i32
  }
  func.func @transform_1(%arg0: i32) -> (i32, i32) {
    %c0_i32 = arith.constant 0 : i32
    %c0_i32_0 = arith.constant 0 : i32
    %c0_i32_1 = arith.constant 0 : i32
    return %c0_i32, %c0_i32_0 : i32, i32
  }
  func.func @transform_2(%arg0: i32) -> (i32, i32) {
    %c0_i32 = arith.constant 0 : i32
    %c0_i32_0 = arith.constant 0 : i32
    %c0_i32_1 = arith.constant 0 : i32
    return %c0_i32, %c0_i32_0 : i32, i32
  }
  func.func @transform_3(%arg0: i32) -> (i32, i32) {
    %c0_i32 = arith.constant 0 : i32
    %c0_i32_0 = arith.constant 0 : i32
    %c0_i32_1 = arith.constant 0 : i32
    return %c0_i32, %c0_i32_0 : i32, i32
  }
  func.func @transform_4(%arg0: i32) -> (i32, i32) {
    %c0_i32 = arith.constant 0 : i32
    %c0_i32_0 = arith.constant 0 : i32
    %c0_i32_1 = arith.constant 0 : i32
    return %c0_i32, %c0_i32_0 : i32, i32
  }
  func.func @transform_5(%arg0: i32) -> (i32, i32) {
    %c0_i32 = arith.constant 0 : i32
    %c0_i32_0 = arith.constant 0 : i32
    return %arg0, %c0_i32 : i32, i32
  }
}

</mosaic_0001>

<llo_original>
// kernel: tpu_custom_call.1
$region0: #{tpu_custom_call.1}
  #allocation0 [shape = 'u32[]', space=smem, size = 0x4, offset = 0x4, fixed_abs, tag = 'smem constant byte address 0x4 - core index']
  #allocation1 [shape = 'u32[144,128]{1,0:T(1,128)}', space=vmem, size = 0x12000, scoped, tag = 'internal scratch']
  %s0 = inlined_call_operand.vmem [shape: f32[8,16], index: 0, kind: input, shape index: {}]
  %s1 = inlined_call_operand.vmem [shape: f32[16,128], index: 1, kind: input, shape index: {}]
  %s2 = inlined_call_operand.vmem [shape: f32[1,128], index: 2, kind: input, shape index: {}]
  %s3 = inlined_call_operand.vmem [shape: f32[128,8], index: 3, kind: input, shape index: {}]
  %s4 = inlined_call_operand.vmem [shape: f32[1,8], index: 4, kind: input, shape index: {}]
  %s5 = inlined_call_operand.hbm [shape: f32[8,8], index: 5, kind: output, shape index: {}]
  %s6 = sld [smem:[#allocation0]]
  $region30: #{tpu_custom_call.1} parent=0
    _
  %s8 = ssub.s32 1, %s6
  %s9 = scalar_select 0, %s8, %s6
  $region1: #{tpu_custom_call.1} parent=0
    #allocation2 [shape = 'u8[4096]{0}', space=vmem, size = 0x1000, scoped, tag = 'output window, operand 0, single buffered']
    #allocation3 [shape = 's32[1]{0}', space=sflag, size = 0x4, scoped, tag = 'scoped memory for tpu_custom_call.1']
    %10 = vsyncpa [#allocation3], 0
    // Predicated region
    $region2: #{tpu_custom_call.1} parent=1 // pred_check
      _
    $region3: #{tpu_custom_call.1} parent=1 // pred_check_branch
      %12 = sbr.rel (0) target = $region5
    $region4: #{tpu_custom_call.1} parent=1 // pred_region
      _
    $region5: #{tpu_custom_call.1} parent=1 // pred_fallthru
      _
    // Predicated region
    $region6: #{tpu_custom_call.1} parent=1 // pred_check
      _
    $region7: #{tpu_custom_call.1} parent=1 // pred_check_branch
      %14 = sbr.rel (0) target = $region9
    $region8: #{tpu_custom_call.1} parent=1 // pred_region
      _
    $region9: #{tpu_custom_call.1} parent=1 // pred_fallthru
      _
    // Predicated region
    $region10: #{tpu_custom_call.1} parent=1 // pred_check
      _
    $region11: #{tpu_custom_call.1} parent=1 // pred_check_branch
      %16 = sbr.rel (0) target = $region13
    $region12: #{tpu_custom_call.1} parent=1 // pred_region
      _
    $region13: #{tpu_custom_call.1} parent=1 // pred_fallthru
      _
    // Predicated region
    $region14: #{tpu_custom_call.1} parent=1 // pred_check
      _
    $region15: #{tpu_custom_call.1} parent=1 // pred_check_branch
      %18 = sbr.rel (0) target = $region17
    $region16: #{tpu_custom_call.1} parent=1 // pred_region
      _
    $region17: #{tpu_custom_call.1} parent=1 // pred_fallthru
      _
    // Predicated region
    $region18: #{tpu_custom_call.1} parent=1 // pred_check
      _
    $region19: #{tpu_custom_call.1} parent=1 // pred_check_branch
      %20 = sbr.rel (0) target = $region21
    $region20: #{tpu_custom_call.1} parent=1 // pred_region
      _
    $region21: #{tpu_custom_call.1} parent=1 // pred_fallthru
      _
    %v21 = vld [vmem:[%s0] sm:$0xff]
    %v22 = vld [vmem:[%s1] sm:$0xff]
    %v23 = vld [vmem:[%s1 + $0x8] sm:$0xff]
    %v24 = vld [vmem:[%s2] sm:$0x1]
    %v26 = vlaneseq
    %v27 = vshrl.u32 %v26, 7
    %v28 = vsub.s32 0, %v27
    %v29 = vrot.slane %v24, %v28
    %vm31 = vcmask 130048
    %v33 = vsel %vm31, %v21, 0
    %35 = vmatprep.subr.mxu0 0.0
    %36 = vmatpush1.msra.mxu0 %v22
    %37 = vmatprep.subr.mxu0 0.0
    %38 = vmatpush1.msra.mxu0 %v23
    %39 = vmatprep.subr.mxu0 0.0
    %40 = vmatpush1.msra.mxu0 0.0
    %41 = vmatprep.subr.mxu0 0.0
    %42 = vmatpush1.msra.mxu0 0.0
    %43 = vmatprep.subr.mxu0 0.0
    %44 = vmatpush1.msra.mxu0 0.0
    %45 = vmatprep.subr.mxu0 0.0
    %46 = vmatpush1.msra.mxu0 0.0
    %47 = vmatprep.subr.mxu0 0.0
    %48 = vmatpush1.msra.mxu0 0.0
    %49 = vmatprep.subr.mxu0 0.0
    %50 = vmatpush1.msra.mxu0 0.0
    %51 = vmatprep.subr.mxu0 0.0
    %52 = vmatpush1.msra.mxu0 0.0
    %53 = vmatprep.subr.mxu0 0.0
    %54 = vmatpush1.msra.mxu0 0.0
    %55 = vmatprep.subr.mxu0 0.0
    %56 = vmatpush1.msra.mxu0 0.0
    %57 = vmatprep.subr.mxu0 0.0
    %58 = vmatpush1.msra.mxu0 0.0
    %59 = vmatprep.subr.mxu0 0.0
    %60 = vmatpush1.msra.mxu0 0.0
    %61 = vmatprep.subr.mxu0 0.0
    %62 = vmatpush1.msra.mxu0 0.0
    %63 = vmatprep.subr.mxu0 0.0
    %64 = vmatpush1.msra.mxu0 0.0
    %65 = vmatprep.subr.mxu0 0.0
    %66 = vmatpush1.msra.mxu0 0.0
    %67 = vmatprep.subr.mxu0 0.0
    %68 = vmatpush1.msra.mxu0 0.0
    %69 = vmatprep.subr.mxu0 0.0
    %70 = vmatpush1.msra.mxu0 0.0
    %71 = vmatprep.subr.mxu0 0.0
    %72 = vmatpush1.msra.mxu0 0.0
    %73 = vmatprep.subr.mxu0 0.0
    %74 = vmatpush1.msra.mxu0 0.0
    %75 = vmatprep.subr.mxu0 0.0
    %76 = vmatpush1.msra.mxu0 0.0
    %77 = vmatprep.subr.mxu0 0.0
    %78 = vmatpush1.msra.mxu0 0.0
    %79 = vmatprep.subr.mxu0 0.0
    %80 = vmatpush1.msra.mxu0 0.0
    %81 = vmatprep.subr.mxu0 0.0
    %82 = vmatpush1.msra.mxu0 0.0
    %83 = vmatprep.subr.mxu0 0.0
    %84 = vmatpush1.msra.mxu0 0.0
    %85 = vmatprep.subr.mxu0 0.0
    %86 = vmatpush1.msra.mxu0 0.0
    %87 = vmatprep.subr.mxu0 0.0
    %88 = vmatpush1.msra.mxu0 0.0
    %89 = vmatprep.subr.mxu0 0.0
    %90 = vmatpush1.msra.mxu0 0.0
    %91 = vmatprep.subr.mxu0 0.0
    %92 = vmatpush1.msra.mxu0 0.0
    %93 = vmatprep.subr.mxu0 0.0
    %94 = vmatpush1.msra.mxu0 0.0
    %95 = vmatprep.subr.mxu0 0.0
    %96 = vmatpush1.msra.mxu0 0.0
    %97 = vmatprep.subr.mxu0 0.0
    %98 = vmatpush1.msra.mxu0 0.0
    %99 = vmatprep.mubr.f32.mxu0 0.0
    %100 = vmatmul.mubr.f32.gmra.mrb[0].mxu0 %v33
    %v101 = vpop.f32.mrb[0].mxu0
    %v102 = vadd.f32 %v29, %v101
    %v103 = vpop.f32.mrb[0].mxu0
    %104 = vdwg.mxu0
    %v105 = vxor.u32 %v102, 2147483648
    %v106 = vmul.f32 %v105, 1.442695
    %v107 = vpow.pop %v106
    %v108 = vadd.f32 %v107, 1.0
    %v109 = vrcp.pop %v108
    %v110 = vmul.f32 1.0, %v109
    %v111 = vld [vmem:[%s3] sm:$0xff]
    %v112 = vld [vmem:[%s3 + $0x8] sm:$0xff]
    %v113 = vld [vmem:[%s3 + $0x10] sm:$0xff]
    %v114 = vld [vmem:[%s3 + $0x18] sm:$0xff]
    %v115 = vld [vmem:[%s3 + $0x20] sm:$0xff]
    %v116 = vld [vmem:[%s3 + $0x28] sm:$0xff]
    %v117 = vld [vmem:[%s3 + $0x30] sm:$0xff]
    %v118 = vld [vmem:[%s3 + $0x38] sm:$0xff]
    %v119 = vld [vmem:[%s3 + $0x40] sm:$0xff]
    %v120 = vld [vmem:[%s3 + $0x48] sm:$0xff]
    %v121 = vld [vmem:[%s3 + $0x50] sm:$0xff]
    %v122 = vld [vmem:[%s3 + $0x58] sm:$0xff]
    %v123 = vld [vmem:[%s3 + $0x60] sm:$0xff]
    %v124 = vld [vmem:[%s3 + $0x68] sm:$0xff]
    %v125 = vld [vmem:[%s3 + $0x70] sm:$0xff]
    %v126 = vld [vmem:[%s3 + $0x78] sm:$0xff]
    %v127 = vld [vmem:[%s4] sm:$0x1]
    %v129 = vlaneseq
    %v130 = vshrl.u32 %v129, 7
    %v131 = vsub.s32 0, %v130
    %v132 = vrot.slane %v127, %v131
    %134 = vmatprep.subr.mxu0 0.0
    %135 = vmatpush1.msra.mxu0 %v111
    %136 = vmatprep.subr.mxu0 0.0
    %137 = vmatpush1.msra.mxu0 %v112
    %138 = vmatprep.subr.mxu0 0.0
    %139 = vmatpush1.msra.mxu0 %v113
    %140 = vmatprep.subr.mxu0 0.0
    %141 = vmatpush1.msra.mxu0 %v114
    %142 = vmatprep.subr.mxu0 0.0
    %143 = vmatpush1.msra.mxu0 %v115
    %144 = vmatprep.subr.mxu0 0.0
    %145 = vmatpush1.msra.mxu0 %v116
    %146 = vmatprep.subr.mxu0 0.0
    %147 = vmatpush1.msra.mxu0 %v117
    %148 = vmatprep.subr.mxu0 0.0
    %149 = vmatpush1.msra.mxu0 %v118
    %150 = vmatprep.subr.mxu0 0.0
    %151 = vmatpush1.msra.mxu0 %v119
    %152 = vmatprep.subr.mxu0 0.0
    %153 = vmatpush1.msra.mxu0 %v120
    %154 = vmatprep.subr.mxu0 0.0
    %155 = vmatpush1.msra.mxu0 %v121
    %156 = vmatprep.subr.mxu0 0.0
    %157 = vmatpush1.msra.mxu0 %v122
    %158 = vmatprep.subr.mxu0 0.0
    %159 = vmatpush1.msra.mxu0 %v123
    %160 = vmatprep.subr.mxu0 0.0
    %161 = vmatpush1.msra.mxu0 %v124
    %162 = vmatprep.subr.mxu0 0.0
    %163 = vmatpush1.msra.mxu0 %v125
    %164 = vmatprep.subr.mxu0 0.0
    %165 = vmatpush1.msra.mxu0 %v126
    %166 = vmatprep.subr.mxu0 0.0
    %167 = vmatpush1.msra.mxu0 0.0
    %168 = vmatprep.subr.mxu0 0.0
    %169 = vmatpush1.msra.mxu0 0.0
    %170 = vmatprep.subr.mxu0 0.0
    %171 = vmatpush1.msra.mxu0 0.0
    %172 = vmatprep.subr.mxu0 0.0
    %173 = vmatpush1.msra.mxu0 0.0
    %174 = vmatprep.subr.mxu0 0.0
    %175 = vmatpush1.msra.mxu0 0.0
    %176 = vmatprep.subr.mxu0 0.0
    %177 = vmatpush1.msra.mxu0 0.0
    %178 = vmatprep.subr.mxu0 0.0
    %179 = vmatpush1.msra.mxu0 0.0
    %180 = vmatprep.subr.mxu0 0.0
    %181 = vmatpush1.msra.mxu0 0.0
    %182 = vmatprep.subr.mxu0 0.0
    %183 = vmatpush1.msra.mxu0 0.0
    %184 = vmatprep.subr.mxu0 0.0
    %185 = vmatpush1.msra.mxu0 0.0
    %186 = vmatprep.subr.mxu0 0.0
    %187 = vmatpush1.msra.mxu0 0.0
    %188 = vmatprep.subr.mxu0 0.0
    %189 = vmatpush1.msra.mxu0 0.0
    %190 = vmatprep.subr.mxu0 0.0
    %191 = vmatpush1.msra.mxu0 0.0
    %192 = vmatprep.subr.mxu0 0.0
    %193 = vmatpush1.msra.mxu0 0.0
    %194 = vmatprep.subr.mxu0 0.0
    %195 = vmatpush1.msra.mxu0 0.0
    %196 = vmatprep.subr.mxu0 0.0
    %197 = vmatpush1.msra.mxu0 0.0
    %198 = vmatprep.mubr.f32.mxu0 0.0
    %199 = vmatmul.mubr.f32.gmra.mrb[0].mxu0 %v110
    %v200 = vpop.f32.mrb[0].mxu0
    %v201 = vadd.f32 %v132, %v200
    %v202 = vpop.f32.mrb[0].mxu0
    %203 = vdwg.mxu0
    %v204 = vxor.u32 %v201, 2147483648
    %v205 = vmul.f32 %v204, 1.442695
    %v206 = vpow.pop %v205
    %v207 = vadd.f32 %v206, 1.0
    %v208 = vrcp.pop %v207
    %v209 = vmul.f32 1.0, %v208
    %vm210 = vcmask 64512
    %211 = vst.msk [vmem:[#allocation2] sm:$0xff] %vm210, %v209
    // Predicated region
    $region22: #{tpu_custom_call.1} parent=1 // pred_check
      _
    $region23: #{tpu_custom_call.1} parent=1 // pred_check_branch
      %213 = sbr.rel (0) target = $region25
    $region24: #{tpu_custom_call.1} parent=1 // pred_region
      %s215 = ssub.s32 128, 128
      %216 = vsyncadd [#allocation3], %s215
      %s218 = sshll.u32 [#allocation2], 4
      %s219 = int_to_ptr.vmem [resolvable:$true] %s218
      %221 = dma.vmem_to_hbm [thread:$0]  %s219, 128, %s5, [#allocation3]
    $region25: #{tpu_custom_call.1} parent=1 // pred_fallthru
      _
    // Predicated region
    $region26: #{tpu_custom_call.1} parent=1 // pred_check
      _
    $region27: #{tpu_custom_call.1} parent=1 // pred_check_branch
      %223 = sbr.rel (0) target = $region29
    $region28: #{tpu_custom_call.1} parent=1 // pred_region
      %224 = dma.done [#allocation3], 128
    $region29: #{tpu_custom_call.1} parent=1 // pred_fallthru
      _
    %225 = vsyncpa [#allocation3], 1

</llo_original>
